<compile_context>
chip_gen: v5e
topology: v5e:2x2
jax: 0.10.0
libtpu: 0.0.40
codegen_flags: <defaults>
</compile_context>

<pallas_src>
import functools

import jax
import jax.numpy as jnp
from jax import lax
from jax.experimental import pallas as pl
from jax.experimental.pallas import tpu as pltpu

LANE = 128


def _round_up(n, m):
    return ((n + m - 1) // m) * m


def _pad_axis(a, target, axis):
    pad = target - a.shape[axis]
    if pad == 0:
        return a
    widths = [(0, 0)] * a.ndim
    widths[axis] = (0, pad)
    return jnp.pad(a, widths)


# ----------------------------------------------------------------------------
# Pallas kernel: fused RMSNorm -> Linear(dim, 2*dim_out) -> SiLU -> Linear(2*dim_out, dim_out)
# ----------------------------------------------------------------------------
def _merge_kernel(x_ref, g_ref, w1_ref, b1_ref, w2_ref, b2_ref, o_ref):
    # RMSNorm as written in the module: F.normalize(x, dim=-1) * sqrt(dim) * gamma.
    # g_ref already holds sqrt(dim) * gamma (prefolded). Zero-padded lanes are inert.
    x = x_ref[...].astype(jnp.float32)                       # [tm, dim_p]
    msq = jnp.sum(x * x, axis=-1, keepdims=True)
    inv = lax.rsqrt(jnp.maximum(msq, 1e-24))                 # == 1 / max(||x||, 1e-12)
    xn = x * inv * g_ref[...]                                # f32 elementwise path

    # Linear 1 + SiLU: bf16 operands on the MXU, f32 accumulate + f32 elementwise.
    h = jnp.dot(xn.astype(jnp.bfloat16), w1_ref[...],
                preferred_element_type=jnp.float32) + b1_ref[...]
    h = h * jax.nn.sigmoid(h)                                # SiLU in f32

    # Linear 2 (lane-dense, padded output width)
    out = jnp.dot(h.astype(jnp.bfloat16), w2_ref[...],
                  preferred_element_type=jnp.float32) + b2_ref[...]
    o_ref[...] = out.astype(o_ref.dtype)


def fused_merge_net(x2d, gvec, w1, b1, w2, b2, *, row_tile=256):
    """x2d: [M, dim] -> [M, dim_out]; the whole net runs inside one Pallas kernel.

    gvec: [dim] f32, already equal to sqrt(dim) * gamma.
    w1/w2 are cast to bf16 for the MXU; biases stay f32.
    """
    M, dim = x2d.shape
    hidden = w1.shape[1]
    dim_out = w2.shape[1]

    # Lane-align every feature axis (output width >= 128 => unmasked full-lane stores).
    dim_p = _round_up(dim, LANE)
    hid_p = _round_up(hidden, LANE)
    dout_p = _round_up(dim_out, LANE)

    # Row tile: big (default 256) for MXU fill + fewer grid steps, clamped for tiny M.
    tm = max(8, min(_round_up(row_tile, 8), _round_up(M, 8)))
    m_p = _round_up(M, tm)

    # Zero padding is inert end-to-end (zero rows / lanes contribute nothing and
    # are sliced off below).
    xp = _pad_axis(_pad_axis(x2d.astype(jnp.float32), dim_p, 1), m_p, 0)
    gp = _pad_axis(gvec.astype(jnp.float32).reshape(1, dim), dim_p, 1)
    w1p = _pad_axis(_pad_axis(w1.astype(jnp.bfloat16), hid_p, 1), dim_p, 0)
    b1p = _pad_axis(b1.astype(jnp.float32).reshape(1, hidden), hid_p, 1)
    w2p = _pad_axis(_pad_axis(w2.astype(jnp.bfloat16), dout_p, 1), hid_p, 0)
    b2p = _pad_axis(b2.astype(jnp.float32).reshape(1, dim_out), dout_p, 1)

    # VMEM budget from the actual (double-buffered) tile sizes, capped at v7x's 64 MiB.
    est = 2 * (tm * dim_p * 4 + tm * dout_p * 4
               + dim_p * 4 + hid_p * 4 + dout_p * 4
               + dim_p * hid_p * 2 + hid_p * dout_p * 2)
    vmem_limit = int(min(64 * 1024 * 1024, max(32 * 1024 * 1024, 2 * est)))

    # TODO(synk): for very large dim / dim_out (weights that no longer fit whole-block
    # in VMEM), add a feature-axis grid dimension with an f32 accumulator scratch and
    # pl.when init/finalize instead of whole-block weights.
    out_p = pl.pallas_call(
        _merge_kernel,
        out_shape=jax.ShapeDtypeStruct((m_p, dout_p), jnp.float32),
        grid_spec=pltpu.PrefetchScalarGridSpec(
            num_scalar_prefetch=0,
            grid=(m_p // tm,),
            in_specs=[
                pl.BlockSpec((tm, dim_p), lambda i: (i, 0)),    # x rows
                pl.BlockSpec((1, dim_p), lambda i: (0, 0)),     # sqrt(dim)*gamma
                pl.BlockSpec((dim_p, hid_p), lambda i: (0, 0)),  # W1 (bf16)
                pl.BlockSpec((1, hid_p), lambda i: (0, 0)),      # b1
                pl.BlockSpec((hid_p, dout_p), lambda i: (0, 0)),  # W2 (bf16)
                pl.BlockSpec((1, dout_p), lambda i: (0, 0)),      # b2
            ],
            out_specs=pl.BlockSpec((tm, dout_p), lambda i: (i, 0)),
        ),
        compiler_params=pltpu.CompilerParams(
            dimension_semantics=("parallel",),
            vmem_limit_bytes=vmem_limit),
    )(xp, gp, w1p, b1p, w2p, b2p)

    return out_p[:M, :dim_out]


# ----------------------------------------------------------------------------
# Glue: hierarchical_cat + parameter container
# ----------------------------------------------------------------------------
def cast_tuple(t, length=1):
    return t if isinstance(t, tuple) else (t,) * length


def hierarchical_cat(tokens, strides):
    assert len(tokens) == len(strides)
    if all(s == 1 for s in strides):
        return jnp.concatenate(tokens, axis=-1)
    # repeat 'b n d -> b (n s) d' then truncate to min seq len
    tokens = [jnp.repeat(t, s, axis=1) for t, s in zip(tokens, strides)]
    min_seq_len = min(t.shape[-2] for t in tokens)
    tokens = [t[..., :min_seq_len, :] for t in tokens]
    return jnp.concatenate(tokens, axis=-1)


class HierarchicalMergePallas:
    """JAX/Pallas port of HierarchicalMerge. Deterministic synthetic parameters."""

    def __init__(self, dims, dim_out, h_strides=1, key=jax.random.PRNGKey(0),
                 row_tile=256):
        dim = sum(dims)
        self.strides = cast_tuple(h_strides, len(dims))
        assert len(self.strides) == len(dims)
        self.dim = dim
        self.dim_out = dim_out
        self.row_tile = row_tile
        hidden = dim_out * 2

        k1, k2, k3, k4 = jax.random.split(key, 4)
        # RMSNorm gamma initialized to ones (as in the module); prefold sqrt(dim).
        self.gamma = jnp.ones((dim,), jnp.float32)
        self.gvec = self.gamma * (float(dim) ** 0.5)
        # Linear weights: small deterministic init (synthetic, not a checkpoint).
        # Stored as bf16 (MXU-native); biases stay f32.
        self.w1 = (jax.random.normal(k1, (dim, hidden), jnp.float32)
                   * (1.0 / dim ** 0.5)).astype(jnp.bfloat16)
        self.b1 = jax.random.normal(k2, (hidden,), jnp.float32) * 0.01
        self.w2 = (jax.random.normal(k3, (hidden, dim_out), jnp.float32)
                   * (1.0 / hidden ** 0.5)).astype(jnp.bfloat16)
        self.b2 = jax.random.normal(k4, (dim_out,), jnp.float32) * 0.01

    def __call__(self, tokens):
        x = hierarchical_cat(tokens, self.strides)          # [B, N, dim]
        B, N, D = x.shape
        assert D == self.dim
        x2d = x.reshape(B * N, D)
        out2d = fused_merge_net(x2d, self.gvec, self.w1, self.b1, self.w2, self.b2,
                                row_tile=self.row_tile)
        return out2d.reshape(B, N, self.dim_out)

    # Pure-JAX f32 reference for validation (same bf16-stored weight values,
    # but all math in f32).
    def reference(self, tokens):
        x = hierarchical_cat(tokens, self.strides).astype(jnp.float32)
        l2 = jnp.sqrt(jnp.sum(x * x, axis=-1, keepdims=True))
        xn = x / jnp.maximum(l2, 1e-12)
        xn = xn * (self.dim ** 0.5) * self.gamma
        h = xn @ self.w1.astype(jnp.float32) + self.b1
        h = h * jax.nn.sigmoid(h)
        return h @ self.w2.astype(jnp.float32) + self.b2


# ----------------------------------------------------------------------------
if __name__ == "__main__":
    key = jax.random.PRNGKey(0)
    kt1, kt2, kt3, kparams = jax.random.split(key, 4)

    # Small shapes: three hierarchies with feature dims (32, 32, 64), batch=2, seq=8
    B, N = 2, 8
    dims = (32, 32, 64)          # sum = 128  (lane-aligned)
    dim_out = 64                 # padded to 128 lanes inside the kernel

    tokens = [
        jax.random.normal(kt1, (B, N, dims[0]), jnp.float32),
        jax.random.normal(kt2, (B, N, dims[1]), jnp.float32),
        jax.random.normal(kt3, (B, N, dims[2]), jnp.float32),
    ]

    module = HierarchicalMergePallas(dims, dim_out, h_strides=1, key=kparams)

    out = module(tokens)
    out = jax.block_until_ready(out)

    ref = module.reference(tokens)
    assert out.shape == (B, N, dim_out), out.shape
    # bf16 MXU operands vs f32 reference: loosen tolerance accordingly.
    max_err = float(jnp.max(jnp.abs(out - ref)))
    assert jnp.allclose(out, ref, atol=1e-1, rtol=1e-2), f"mismatch vs reference, max|d|={max_err}"

    print("KERNEL_OK")
</pallas_src>

<mosaic_0001>
module attributes {stable_mosaic.version = 11 : i64} {
  func.func @_merge_kernel(%arg0: i32, %arg1: memref<16x128xf32, #tpu.memory_space<vmem>>, %arg2: memref<1x128xf32, #tpu.memory_space<vmem>>, %arg3: memref<128x128xbf16, #tpu.memory_space<vmem>>, %arg4: memref<1x128xf32, #tpu.memory_space<vmem>>, %arg5: memref<128x128xbf16, #tpu.memory_space<vmem>>, %arg6: memref<1x128xf32, #tpu.memory_space<vmem>>, %arg7: memref<16x128xf32, #tpu.memory_space<vmem>>) attributes {dimension_semantics = [#tpu.dimension_semantics<parallel>], iteration_bounds = array<i64: 1>, scalar_prefetch = 0 : i64, scratch_operands = 0 : i64, tpu.core_type = #tpu.core_type<tc>, window_params = [{transform_indices = @transform_0, window_bounds = array<i64: 16, 128>}, {pipeline_mode = #tpu.pipeline_mode<synchronous>, transform_indices = @transform_1, window_bounds = array<i64: 1, 128>}, {pipeline_mode = #tpu.pipeline_mode<synchronous>, transform_indices = @transform_2, window_bounds = array<i64: 128, 128>}, {pipeline_mode = #tpu.pipeline_mode<synchronous>, transform_indices = @transform_3, window_bounds = array<i64: 1, 128>}, {pipeline_mode = #tpu.pipeline_mode<synchronous>, transform_indices = @transform_4, window_bounds = array<i64: 128, 128>}, {pipeline_mode = #tpu.pipeline_mode<synchronous>, transform_indices = @transform_5, window_bounds = array<i64: 1, 128>}, {transform_indices = @transform_6, window_bounds = array<i64: 16, 128>}]} {
    %c0 = arith.constant 0 : index
    %c0_0 = arith.constant 0 : index
    %0 = vector.load %arg1[%c0, %c0_0] : memref<16x128xf32, #tpu.memory_space<vmem>>, vector<16x128xf32>
    %1 = arith.mulf %0, %0 : vector<16x128xf32>
    %cst = arith.constant dense<0.000000e+00> : vector<16xf32>
    %2 = vector.multi_reduction <add>, %1, %cst [1] : vector<16x128xf32> to vector<16xf32>
    %3 = vector.shape_cast %2 : vector<16xf32> to vector<16x1xf32>
    %cst_1 = arith.constant 1.000000e-24 : f32
    %4 = vector.broadcast %cst_1 : f32 to vector<16x1xf32>
    %5 = arith.maximumf %3, %4 : vector<16x1xf32>
    %6 = math.rsqrt %5 : vector<16x1xf32>
    %7 = vector.broadcast %6 : vector<16x1xf32> to vector<16x128xf32>
    %8 = arith.mulf %0, %7 : vector<16x128xf32>
    %c0_2 = arith.constant 0 : index
    %c0_3 = arith.constant 0 : index
    %9 = vector.load %arg2[%c0_2, %c0_3] : memref<1x128xf32, #tpu.memory_space<vmem>>, vector<1x128xf32>
    %10 = vector.broadcast %9 : vector<1x128xf32> to vector<16x128xf32>
    %11 = arith.mulf %8, %10 : vector<16x128xf32>
    %12 = arith.truncf %11 : vector<16x128xf32> to vector<16x128xbf16>
    %c0_4 = arith.constant 0 : index
    %c0_5 = arith.constant 0 : index
    %13 = vector.load %arg3[%c0_4, %c0_5] : memref<128x128xbf16, #tpu.memory_space<vmem>>, vector<128x128xbf16>
    %cst_6 = arith.constant dense<0.000000e+00> : vector<16x128xf32>
    %14 = tpu.matmul %12, %13, %cst_6 {dimension_numbers = #tpu.dot_dimension_numbers<[1], [0], [0], [1], [0, 0, 1, 1], [], []>} : vector<16x128xbf16>, vector<128x128xbf16>, vector<16x128xf32> -> vector<16x128xf32>
    %c0_7 = arith.constant 0 : index
    %c0_8 = arith.constant 0 : index
    %15 = vector.load %arg4[%c0_7, %c0_8] : memref<1x128xf32, #tpu.memory_space<vmem>>, vector<1x128xf32>
    %16 = vector.broadcast %15 : vector<1x128xf32> to vector<16x128xf32>
    %17 = arith.addf %14, %16 : vector<16x128xf32>
    %18 = arith.negf %17 : vector<16x128xf32>
    %19 = math.exp %18 : vector<16x128xf32>
    %cst_9 = arith.constant 1.000000e+00 : f32
    %20 = vector.broadcast %cst_9 : f32 to vector<16x128xf32>
    %21 = arith.addf %20, %19 : vector<16x128xf32>
    %22 = arith.divf %20, %21 : vector<16x128xf32>
    %23 = arith.mulf %17, %22 : vector<16x128xf32>
    %24 = arith.truncf %23 : vector<16x128xf32> to vector<16x128xbf16>
    %c0_10 = arith.constant 0 : index
    %c0_11 = arith.constant 0 : index
    %25 = vector.load %arg5[%c0_10, %c0_11] : memref<128x128xbf16, #tpu.memory_space<vmem>>, vector<128x128xbf16>
    %cst_12 = arith.constant dense<0.000000e+00> : vector<16x128xf32>
    %26 = tpu.matmul %24, %25, %cst_12 {dimension_numbers = #tpu.dot_dimension_numbers<[1], [0], [0], [1], [0, 0, 1, 1], [], []>} : vector<16x128xbf16>, vector<128x128xbf16>, vector<16x128xf32> -> vector<16x128xf32>
    %c0_13 = arith.constant 0 : index
    %c0_14 = arith.constant 0 : index
    %27 = vector.load %arg6[%c0_13, %c0_14] : memref<1x128xf32, #tpu.memory_space<vmem>>, vector<1x128xf32>
    %28 = vector.broadcast %27 : vector<1x128xf32> to vector<16x128xf32>
    %29 = arith.addf %26, %28 : vector<16x128xf32>
    %c0_15 = arith.constant 0 : index
    %c0_16 = arith.constant 0 : index
    %30 = vector.load %arg7[%c0_15, %c0_16] : memref<16x128xf32, #tpu.memory_space<vmem>>, vector<16x128xf32>
    tpu.vector_store %arg7[%c0_15, %c0_16], %29 {strides = array<i32>} : memref<16x128xf32, #tpu.memory_space<vmem>>, vector<16x128xf32>,
    return
  }
  func.func @transform_0(%arg0: i32) -> (i32, i32) {
    %c0_i32 = arith.constant 0 : i32
    %c0_i32_0 = arith.constant 0 : i32
    return %arg0, %c0_i32 : i32, i32
  }
  func.func @transform_1(%arg0: i32) -> (i32, i32) {
    %c0_i32 = arith.constant 0 : i32
    %c0_i32_0 = arith.constant 0 : i32
    %c0_i32_1 = arith.constant 0 : i32
    return %c0_i32, %c0_i32_0 : i32, i32
  }
  func.func @transform_2(%arg0: i32) -> (i32, i32) {
    %c0_i32 = arith.constant 0 : i32
    %c0_i32_0 = arith.constant 0 : i32
    %c0_i32_1 = arith.constant 0 : i32
    return %c0_i32, %c0_i32_0 : i32, i32
  }
  func.func @transform_3(%arg0: i32) -> (i32, i32) {
    %c0_i32 = arith.constant 0 : i32
    %c0_i32_0 = arith.constant 0 : i32
    %c0_i32_1 = arith.constant 0 : i32
    return %c0_i32, %c0_i32_0 : i32, i32
  }
  func.func @transform_4(%arg0: i32) -> (i32, i32) {
    %c0_i32 = arith.constant 0 : i32
    %c0_i32_0 = arith.constant 0 : i32
    %c0_i32_1 = arith.constant 0 : i32
    return %c0_i32, %c0_i32_0 : i32, i32
  }
  func.func @transform_5(%arg0: i32) -> (i32, i32) {
    %c0_i32 = arith.constant 0 : i32
    %c0_i32_0 = arith.constant 0 : i32
    %c0_i32_1 = arith.constant 0 : i32
    return %c0_i32, %c0_i32_0 : i32, i32
  }
  func.func @transform_6(%arg0: i32) -> (i32, i32) {
    %c0_i32 = arith.constant 0 : i32
    %c0_i32_0 = arith.constant 0 : i32
    return %arg0, %c0_i32 : i32, i32
  }
}

</mosaic_0001>

<llo_original>
// kernel: tpu_custom_call.1
$region0: #{tpu_custom_call.1}
  #allocation0 [shape = 'u32[]', space=smem, size = 0x4, offset = 0x4, fixed_abs, tag = 'smem constant byte address 0x4 - core index']
  #allocation1 [shape = 'u32[72,128]{1,0:T(1,128)}', space=vmem, size = 0x9000, scoped, tag = 'internal scratch']
  %s0 = inlined_call_operand.hbm [shape: f32[16,128], index: 0, kind: input, shape index: {}]
  %s1 = inlined_call_operand.hbm [shape: f32[1,128], index: 1, kind: input, shape index: {}]
  %s2 = inlined_call_operand.hbm [shape: bf16[128,128], index: 2, kind: input, shape index: {}]
  %s3 = inlined_call_operand.vmem [shape: f32[1,128], index: 3, kind: input, shape index: {}]
  %s4 = inlined_call_operand.hbm [shape: bf16[128,128], index: 4, kind: input, shape index: {}]
  %s5 = inlined_call_operand.vmem [shape: f32[1,128], index: 5, kind: input, shape index: {}]
  %s6 = inlined_call_operand.hbm [shape: f32[16,128], index: 6, kind: output, shape index: {}]
  %s7 = sld [smem:[#allocation0]]
  $region50: #{tpu_custom_call.1} parent=0
    _
  %s9 = ssub.s32 1, %s7
  %s10 = scalar_select 0, %s9, %s7
  $region1: #{tpu_custom_call.1} parent=0
    #allocation2 [shape = 'u8[8192]{0}', space=vmem, size = 0x2000, scoped, tag = 'input window, operand 0, single buffered']
    #allocation3 [shape = 's32[1]{0}', space=sflag, size = 0x4, scoped, tag = 'scoped memory for tpu_custom_call.1']
    #allocation4 [shape = 's32[1]{0}', space=sflag, size = 0x4, scoped, tag = 'scoped memory for tpu_custom_call.1']
    #allocation5 [shape = 'u8[512]{0}', space=vmem, size = 0x400, scoped, tag = 'input window, operand 1, single buffered']
    #allocation6 [shape = 's32[1]{0}', space=sflag, size = 0x4, scoped, tag = 'scoped memory for tpu_custom_call.1']
    #allocation7 [shape = 'u8[32768]{0}', space=vmem, size = 0x8000, scoped, tag = 'input window, operand 2, single buffered']
    #allocation8 [shape = 'u8[32768]{0}', space=vmem, size = 0x8000, scoped, tag = 'input window, operand 4, single buffered']
    #allocation9 [shape = 's32[1]{0}', space=sflag, size = 0x4, scoped, tag = 'scoped memory for tpu_custom_call.1']
    #allocation10 [shape = 'u8[8192]{0}', space=vmem, size = 0x2000, scoped, tag = 'output window, operand 0, single buffered']
    %11 = vsyncpa [#allocation3], 0
    %12 = vsyncpa [#allocation6], 0
    %13 = vsyncpa [#allocation9], 0
    %14 = vsyncpa [#allocation4], 0
    // Predicated region
    $region2: #{tpu_custom_call.1} parent=1 // pred_check
      _
    $region3: #{tpu_custom_call.1} parent=1 // pred_check_branch
      %16 = sbr.rel (0) target = $region5
    $region4: #{tpu_custom_call.1} parent=1 // pred_region
      %18 = vsyncadd [#allocation3], 0
      %s19 = sshll.u32 %s0, 4
      %s20 = int_to_ptr.hbm [resolvable:$true] %s19
      %s21 = sshll.u32 [#allocation2], 4
      %s22 = int_to_ptr.vmem [resolvable:$true] %s21
      %27 = dma.hbm_to_vmem [thread:$0]  %s20, 256, %s22, [#allocation3], 128, 128, 8
    $region5: #{tpu_custom_call.1} parent=1 // pred_fallthru
      _
    // Predicated region
    $region6: #{tpu_custom_call.1} parent=1 // pred_check
      _
    $region7: #{tpu_custom_call.1} parent=1 // pred_check_branch
      %29 = sbr.rel (0) target = $region9
    $region8: #{tpu_custom_call.1} parent=1 // pred_region
      %31 = vsyncadd [#allocation6], 0
      %s33 = sshll.u32 %s1, 4
      %s34 = int_to_ptr.hbm [resolvable:$true] %s33
      %s35 = sshll.u32 [#allocation5], 4
      %s36 = int_to_ptr.vmem [resolvable:$true] %s35
      %38 = dma.hbm_to_vmem [thread:$0]  %s34, 16, %s36, [#allocation6]
    $region9: #{tpu_custom_call.1} parent=1 // pred_fallthru
      _
    // Predicated region
    $region10: #{tpu_custom_call.1} parent=1 // pred_check
      _
    $region11: #{tpu_custom_call.1} parent=1 // pred_check_branch
      %40 = sbr.rel (0) target = $region13
    $region12: #{tpu_custom_call.1} parent=1 // pred_region
      %42 = vsyncadd [#allocation6], 0
      %s43 = sshll.u32 %s2, 4
      %s44 = int_to_ptr.hbm [resolvable:$true] %s43
      %s45 = sshll.u32 [#allocation7], 4
      %s46 = int_to_ptr.vmem [resolvable:$true] %s45
      %51 = dma.hbm_to_vmem [thread:$0]  %s44, 1024, %s46, [#allocation6], 64, 64, 4
    $region13: #{tpu_custom_call.1} parent=1 // pred_fallthru
      _
    // Predicated region
    $region14: #{tpu_custom_call.1} parent=1 // pred_check
      _
    $region15: #{tpu_custom_call.1} parent=1 // pred_check_branch
      %53 = sbr.rel (0) target = $region17
    $region16: #{tpu_custom_call.1} parent=1 // pred_region
      _
    $region17: #{tpu_custom_call.1} parent=1 // pred_fallthru
      _
    // Predicated region
    $region18: #{tpu_custom_call.1} parent=1 // pred_check
      _
    $region19: #{tpu_custom_call.1} parent=1 // pred_check_branch
      %55 = sbr.rel (0) target = $region21
    $region20: #{tpu_custom_call.1} parent=1 // pred_region
      %57 = vsyncadd [#allocation9], 0
      %s58 = sshll.u32 %s4, 4
      %s59 = int_to_ptr.hbm [resolvable:$true] %s58
      %s60 = sshll.u32 [#allocation8], 4
      %s61 = int_to_ptr.vmem [resolvable:$true] %s60
      %66 = dma.hbm_to_vmem [thread:$0]  %s59, 1024, %s61, [#allocation9], 64, 64, 4
    $region21: #{tpu_custom_call.1} parent=1 // pred_fallthru
      _
    // Predicated region
    $region22: #{tpu_custom_call.1} parent=1 // pred_check
      _
    $region23: #{tpu_custom_call.1} parent=1 // pred_check_branch
      %68 = sbr.rel (0) target = $region25
    $region24: #{tpu_custom_call.1} parent=1 // pred_region
      _
    $region25: #{tpu_custom_call.1} parent=1 // pred_fallthru
      _
    // Predicated region
    $region26: #{tpu_custom_call.1} parent=1 // pred_check
      _
    $region27: #{tpu_custom_call.1} parent=1 // pred_check_branch
      %70 = sbr.rel (0) target = $region29
    $region28: #{tpu_custom_call.1} parent=1 // pred_region
      %72 = dma.done [#allocation3], 256
    $region29: #{tpu_custom_call.1} parent=1 // pred_fallthru
      _
    // Predicated region
    $region30: #{tpu_custom_call.1} parent=1 // pred_check
      _
    $region31: #{tpu_custom_call.1} parent=1 // pred_check_branch
      %74 = sbr.rel (0) target = $region33
    $region32: #{tpu_custom_call.1} parent=1 // pred_region
      %76 = dma.done [#allocation6], 16
    $region33: #{tpu_custom_call.1} parent=1 // pred_fallthru
      _
    // Predicated region
    $region34: #{tpu_custom_call.1} parent=1 // pred_check
      _
    $region35: #{tpu_custom_call.1} parent=1 // pred_check_branch
      %78 = sbr.rel (0) target = $region37
    $region36: #{tpu_custom_call.1} parent=1 // pred_region
      %80 = dma.done [#allocation6], 1024
    $region37: #{tpu_custom_call.1} parent=1 // pred_fallthru
      _
    // Predicated region
    $region38: #{tpu_custom_call.1} parent=1 // pred_check
      _
    $region39: #{tpu_custom_call.1} parent=1 // pred_check_branch
      %82 = sbr.rel (0) target = $region41
    $region40: #{tpu_custom_call.1} parent=1 // pred_region
      %84 = dma.done [#allocation9], 1024
    $region41: #{tpu_custom_call.1} parent=1 // pred_fallthru
      _
    %v85 = vld [vmem:[#allocation2] sm:$0xff]
    %v86 = vld [vmem:[#allocation2 + $0x8] sm:$0xff]
    %v87 = vmul.f32 %v85, %v85
    %v88 = vmul.f32 %v86, %v86
    %89 = vadd.xlane.f32.xlu0 %v87
    %v90 = vpop.xlane.xlu0 %89
    %91 = vadd.xlane.f32.xlu0 %v88
    %v92 = vpop.xlane.xlu0 %91
    %v93 = vmax.f32 %v90, 1e-24
    %v94 = vmax.f32 %v92, 1e-24
    %v95 = vrsqrt.pop %v93
    %v96 = vmul.f32 %v95, %v93
    %v97 = vmul.f32 %v96, %v95
    %v98 = vmul.f32 0.5, %v97
    %v99 = vsub.f32 1.5, %v98
    %v100 = vmul.f32 %v95, %v99
    %vm101 = vweird.f32 %v93
    %vm102 = vweird.f32 %v95
    %vm103 = vmor %vm101, %vm102
    %v104 = vsel %vm103, %v95, %v100
    %v105 = vrsqrt.pop %v94
    %v106 = vmul.f32 %v105, %v94
    %v107 = vmul.f32 %v106, %v105
    %v108 = vmul.f32 0.5, %v107
    %v109 = vsub.f32 1.5, %v108
    %v110 = vmul.f32 %v105, %v109
    %vm111 = vweird.f32 %v94
    %vm112 = vweird.f32 %v105
    %vm113 = vmor %vm111, %vm112
    %v114 = vsel %vm113, %v105, %v110
    %v115 = vmul.f32 %v85, %v104
    %v116 = vmul.f32 %v86, %v114
    %v117 = vld [vmem:[#allocation5] sm:$0x1]
    %v119 = vperm.slane %v117, 0
    %v121 = vmul.f32 %v115, %v119
    %v122 = vmul.f32 %v116, %v119
    %v123 = vpack.c.bf16 %v122, %v121
    %v124 = vld [vmem:[#allocation7] sm:$0xf]
    %v125 = vld [vmem:[#allocation7 + $0x4] sm:$0xf]
    %v126 = vld [vmem:[#allocation7 + $0x8] sm:$0xf]
    %v127 = vld [vmem:[#allocation7 + $0xc] sm:$0xf]
    %v128 = vld [vmem:[#allocation7 + $0x10] sm:$0xf]
    %v129 = vld [vmem:[#allocation7 + $0x14] sm:$0xf]
    %v130 = vld [vmem:[#allocation7 + $0x18] sm:$0xf]
    %v131 = vld [vmem:[#allocation7 + $0x1c] sm:$0xf]
    %v132 = vld [vmem:[#allocation7 + $0x20] sm:$0xf]
    %v133 = vld [vmem:[#allocation7 + $0x24] sm:$0xf]
    %v134 = vld [vmem:[#allocation7 + $0x28] sm:$0xf]
    %v135 = vld [vmem:[#allocation7 + $0x2c] sm:$0xf]
    %v136 = vld [vmem:[#allocation7 + $0x30] sm:$0xf]
    %v137 = vld [vmem:[#allocation7 + $0x34] sm:$0xf]
    %v138 = vld [vmem:[#allocation7 + $0x38] sm:$0xf]
    %v139 = vld [vmem:[#allocation7 + $0x3c] sm:$0xf]
    %v140 = vld [vmem:[%s3] sm:$0x1]
    %v142 = vperm.slane %v140, 0
    %v160 = vunpack.c.l.b16 %v124
    %v161 = vunpack.c.l.b16 %v125
    %v162 = vunpack.c.l.b16 %v126
    %v163 = vunpack.c.l.b16 %v127
    %v164 = vunpack.c.l.b16 %v128
    %v165 = vunpack.c.l.b16 %v129
    %v166 = vunpack.c.l.b16 %v130
    %v167 = vunpack.c.l.b16 %v131
    %v168 = vunpack.c.l.b16 %v132
    %v169 = vunpack.c.l.b16 %v133
    %v170 = vunpack.c.l.b16 %v134
    %v171 = vunpack.c.l.b16 %v135
    %v172 = vunpack.c.l.b16 %v136
    %v173 = vunpack.c.l.b16 %v137
    %v174 = vunpack.c.l.b16 %v138
    %v175 = vunpack.c.l.b16 %v139
    %v176 = vpack.c.b16 %v161, %v160
    %v177 = vpack.c.b16 %v163, %v162
    %v178 = vpack.c.b16 %v165, %v164
    %v179 = vpack.c.b16 %v167, %v166
    %v180 = vpack.c.b16 %v169, %v168
    %v181 = vpack.c.b16 %v171, %v170
    %v182 = vpack.c.b16 %v173, %v172
    %v183 = vpack.c.b16 %v175, %v174
    %192 = vmatpush.bf16.msra.mxu0 %v183
    %193 = vmatpush.bf16.msra.mxu0 %v182
    %194 = vmatpush.bf16.msra.mxu0 %v181
    %195 = vmatpush.bf16.msra.mxu0 %v180
    %196 = vmatpush.bf16.msra.mxu0 %v179
    %197 = vmatpush.bf16.msra.mxu0 %v178
    %198 = vmatpush.bf16.msra.mxu0 %v177
    %199 = vmatpush.bf16.msra.mxu0 %v176
    %200 = vmatmul.bf16.gmra.mxu0 %v123
    %v201 = vpop.f32.mrf.mxu0
    %v202 = vadd.f32 %v142, %v201
    %v203 = vpop.f32.mrf.mxu0
    %v204 = vadd.f32 %v142, %v203
    %205 = vdwg.mxu0
    %v206 = vxor.u32 %v202, 2147483648
    %v207 = vxor.u32 %v204, 2147483648
    %v208 = vmul.f32 %v206, 1.442695
    %v209 = vpow.pop %v208
    %v210 = vmul.f32 %v207, 1.442695
    %v211 = vpow.pop %v210
    %v212 = vadd.f32 %v209, 1.0
    %v213 = vadd.f32 %v211, 1.0
    %v214 = vrcp.pop %v212
    %v215 = vmul.f32 %v212, %v214
    %v216 = vsub.f32 1.0, %v215
    %v217 = vmul.f32 %v214, %v216
    %v218 = vadd.f32 %v214, %v217
    %vm219 = vweird.f32 %v212
    %vm220 = vweird.f32 %v214
    %vm221 = vmor %vm219, %vm220
    %v222 = vsel %vm221, %v214, %v218
    %v223 = vand.u32 2147483647, %v212
    %vm224 = vcmp.eq.f32.partialorder %v223, 8.507059e+37
    %v225 = vand.u32 %v212, 2147483648
    %v226 = vor.u32 1.1754944e-38, %v225
    %v227 = vsel %vm224, %v226, %v222
    %v228 = vmul.f32 1.0, %v227
    %v229 = vrcp.pop %v213
    %v230 = vmul.f32 %v213, %v229
    %v231 = vsub.f32 1.0, %v230
    %v232 = vmul.f32 %v229, %v231
    %v233 = vadd.f32 %v229, %v232
    %vm234 = vweird.f32 %v213
    %vm235 = vweird.f32 %v229
    %vm236 = vmor %vm234, %vm235
    %v237 = vsel %vm236, %v229, %v233
    %v238 = vand.u32 2147483647, %v213
    %vm239 = vcmp.eq.f32.partialorder %v238, 8.507059e+37
    %v240 = vand.u32 %v213, 2147483648
    %v241 = vor.u32 1.1754944e-38, %v240
    %v242 = vsel %vm239, %v241, %v237
    %v243 = vmul.f32 1.0, %v242
    %v244 = vmul.f32 %v202, %v228
    %v245 = vmul.f32 %v204, %v243
    %v246 = vpack.c.bf16 %v245, %v244
    %v247 = vld [vmem:[#allocation8] sm:$0xf]
    %v248 = vld [vmem:[#allocation8 + $0x4] sm:$0xf]
    %v249 = vld [vmem:[#allocation8 + $0x8] sm:$0xf]
    %v250 = vld [vmem:[#allocation8 + $0xc] sm:$0xf]
    %v251 = vld [vmem:[#allocation8 + $0x10] sm:$0xf]
    %v252 = vld [vmem:[#allocation8 + $0x14] sm:$0xf]
    %v253 = vld [vmem:[#allocation8 + $0x18] sm:$0xf]
    %v254 = vld [vmem:[#allocation8 + $0x1c] sm:$0xf]
    %v255 = vld [vmem:[#allocation8 + $0x20] sm:$0xf]
    %v256 = vld [vmem:[#allocation8 + $0x24] sm:$0xf]
    %v257 = vld [vmem:[#allocation8 + $0x28] sm:$0xf]
    %v258 = vld [vmem:[#allocation8 + $0x2c] sm:$0xf]
    %v259 = vld [vmem:[#allocation8 + $0x30] sm:$0xf]
    %v260 = vld [vmem:[#allocation8 + $0x34] sm:$0xf]
    %v261 = vld [vmem:[#allocation8 + $0x38] sm:$0xf]
    %v262 = vld [vmem:[#allocation8 + $0x3c] sm:$0xf]
    %v263 = vld [vmem:[%s5] sm:$0x1]
    %v265 = vperm.slane %v263, 0
    %v283 = vunpack.c.l.b16 %v247
    %v284 = vunpack.c.l.b16 %v248
    %v285 = vunpack.c.l.b16 %v249
    %v286 = vunpack.c.l.b16 %v250
    %v287 = vunpack.c.l.b16 %v251
    %v288 = vunpack.c.l.b16 %v252
    %v289 = vunpack.c.l.b16 %v253
    %v290 = vunpack.c.l.b16 %v254
    %v291 = vunpack.c.l.b16 %v255
    %v292 = vunpack.c.l.b16 %v256
    %v293 = vunpack.c.l.b16 %v257
    %v294 = vunpack.c.l.b16 %v258
    %v295 = vunpack.c.l.b16 %v259
    %v296 = vunpack.c.l.b16 %v260
    %v297 = vunpack.c.l.b16 %v261
    %v298 = vunpack.c.l.b16 %v262
    %v299 = vpack.c.b16 %v284, %v283
    %v300 = vpack.c.b16 %v286, %v285
    %v301 = vpack.c.b16 %v288, %v287
    %v302 = vpack.c.b16 %v290, %v289
    %v303 = vpack.c.b16 %v292, %v291
    %v304 = vpack.c.b16 %v294, %v293
    %v305 = vpack.c.b16 %v296, %v295
    %v306 = vpack.c.b16 %v298, %v297
    %315 = vmatpush.bf16.msra.mxu0 %v306
    %316 = vmatpush.bf16.msra.mxu0 %v305
    %317 = vmatpush.bf16.msra.mxu0 %v304
    %318 = vmatpush.bf16.msra.mxu0 %v303
    %319 = vmatpush.bf16.msra.mxu0 %v302
    %320 = vmatpush.bf16.msra.mxu0 %v301
    %321 = vmatpush.bf16.msra.mxu0 %v300
    %322 = vmatpush.bf16.msra.mxu0 %v299
    %323 = vmatmul.bf16.gmra.mxu0 %v246
    %v324 = vpop.f32.mrf.mxu0
    %v325 = vadd.f32 %v265, %v324
    %v326 = vpop.f32.mrf.mxu0
    %v327 = vadd.f32 %v265, %v326
    %328 = vdwg.mxu0
    %329 = vst [vmem:[#allocation10] sm:$0xff] %v325
    %330 = vst [vmem:[#allocation10 + $0x8] sm:$0xff] %v327
    // Predicated region
    $region42: #{tpu_custom_call.1} parent=1 // pred_check
      _
    $region43: #{tpu_custom_call.1} parent=1 // pred_check_branch
      %332 = sbr.rel (0) target = $region45
    $region44: #{tpu_custom_call.1} parent=1 // pred_region
      %334 = vsyncadd [#allocation4], 0
      %s335 = sshll.u32 [#allocation10], 4
      %s336 = int_to_ptr.vmem [resolvable:$true] %s335
      %s337 = sshll.u32 %s6, 4
      %s338 = int_to_ptr.hbm [resolvable:$true] %s337
      %343 = dma.vmem_to_hbm [thread:$0]  %s336, 256, %s338, [#allocation4], 128, 128, 8
    $region45: #{tpu_custom_call.1} parent=1 // pred_fallthru
      _
    // Predicated region
    $region46: #{tpu_custom_call.1} parent=1 // pred_check
      _
    $region47: #{tpu_custom_call.1} parent=1 // pred_check_branch
      %345 = sbr.rel (0) target = $region49
    $region48: #{tpu_custom_call.1} parent=1 // pred_region
      %347 = dma.done [#allocation4], 256
    $region49: #{tpu_custom_call.1} parent=1 // pred_fallthru
      _
    %348 = vsyncpa [#allocation3], 1
    %349 = vsyncpa [#allocation6], 1
    %350 = vsyncpa [#allocation9], 1
    %351 = vsyncpa [#allocation4], 1

</llo_original>
